<compile_context>
chip_gen: v5e
topology: v5e:2x2
jax: 0.10.0
libtpu: 0.0.40
codegen_flags: <defaults>
</compile_context>

<pallas_src>
import functools

import jax
import jax.numpy as jnp
from jax.experimental import pallas as pl
from jax.experimental.pallas import tpu as pltpu


def _ae_loss_kernel(inv_distance, distance, margin_push, k_valid, block_rows,
                    ntpc, n_pad, has_cen, *refs):
    if has_cen:
        (tag_ref, gather_ref, cen_ref,
         avg_row_ref, avg_col_ref, mask_ref, out_ref) = refs
    else:
        (tag_ref, gather_ref,
         avg_row_ref, avg_col_ref, mask_ref, out_ref) = refs
        cen_ref = None

    c = pl.program_id(0)   # core split (parallel)
    i = pl.program_id(1)   # K tiles for this core (arbitrary / reduction)

    def scalar_tile(s):
        # Place scalar s at [0, 0] of an otherwise-zero (8, 128) tile.
        r = jax.lax.broadcasted_iota(jnp.int32, (8, 128), 0)
        l = jax.lax.broadcasted_iota(jnp.int32, (8, 128), 1)
        return jnp.where((r == 0) & (l == 0), s, 0.0)

    # Zero this core's resident accumulator block at the start of its K loop.
    @pl.when(i == 0)
    def _init():
        out_ref[...] = jnp.zeros_like(out_ref)

    # ---- push term: pairwise hinge over instance averages (core 0, once) ----
    @pl.when((c == 0) & (i == 0))
    def _push():
        avg_r = avg_row_ref[...].astype(jnp.float32)            # (1, n)
        avg_c = avg_col_ref[...].astype(jnp.float32)            # (n, 1)
        dist = (jnp.broadcast_to(avg_r, (n_pad, n_pad)) -
                jnp.broadcast_to(avg_c, (n_pad, n_pad)))        # avg[j]-avg[i]
        dist = jnp.maximum(distance + margin_push - jnp.abs(dist), 0.0)
        m = mask_ref[...].astype(jnp.float32)                   # int8 -> f32
        out_ref[0, 2] = scalar_tile(jnp.sum(dist * m))
        out_ref[0, 3] = scalar_tile(jnp.sum(m))

    # ---- pull term: partial reduction over this K tile ----
    tile = c * ntpc + i                       # logical (unclamped) tile index
    base = tile * (block_rows * 128)
    row_id = jax.lax.broadcasted_iota(jnp.int32, (block_rows, 128), 0)
    lane_id = jax.lax.broadcasted_iota(jnp.int32, (block_rows, 128), 1)
    valid = (base + row_id * 128 + lane_id) < k_valid   # masks ragged tail,
    #   OOB rows of partial blocks, and clamped duplicate tiles.

    # Double round matches the PyTorch module: round(round(g/d) * d).
    g = jnp.round(gather_ref[...].astype(jnp.float32) * inv_distance) * distance
    tag = (tag_ref[...].astype(jnp.float32) - jnp.round(g)) ** 2

    def tile_reduce(x):
        # (block_rows, 128) -> (8, 128) partial sums via pure VPU adds.
        if block_rows % 8 == 0:
            return x.reshape(block_rows // 8, 8, 128).sum(axis=0)
        # Tiny-K fallback (single block equal to the full array): scalar reduce.
        return scalar_tile(jnp.sum(x))

    if has_cen:
        cen = cen_ref[...].astype(jnp.float32)
        out_ref[0, 0] += tile_reduce(jnp.where(valid, tag * cen, 0.0))
        out_ref[0, 1] += tile_reduce(jnp.where(valid, cen, 0.0))
    else:
        out_ref[0, 0] += tile_reduce(jnp.where(valid, tag, 0.0))


def ae_loss(lof_tag_img, lof_tag_avg_img, lof_tag_avg_gather_img, mask,
            centerness_img=None, *,
            pull_factor, push_factor, distance, margin_push,
            max_block_rows=2048, num_core_splits=2):
    K = int(lof_tag_img.shape[0])
    N = int(lof_tag_avg_img.shape[0])
    has_cen = centerness_img is not None

    # ---- K side: lane-dense (rows, 128) view; pad <=127 elems iff ragged ----
    rows = max(-(-K // 128), 1)
    K128 = rows * 128

    def as_rows128(x):
        if K128 != K:
            x = jnp.pad(x, (0, K128 - K))     # at most 127 padded elements
        return x.reshape(rows, 128)           # free when K % 128 == 0

    k_inputs = [as_rows128(lof_tag_img), as_rows128(lof_tag_avg_gather_img)]
    if has_cen:
        k_inputs.append(as_rows128(centerness_img))

    block_rows = min(rows, -(-max_block_rows // 8) * 8)
    num_tiles = -(-rows // block_rows)
    splits = max(1, min(num_core_splits, num_tiles))   # 2 -> dual-TC on v7x
    ntpc = -(-num_tiles // splits)                     # tiles per core

    # ---- N side: push-term inputs (instance averages + int8 pair mask) ----
    n_pad = max(-(-N // 128) * 128, 128)
    avg = lof_tag_avg_img
    mask_i8 = mask.reshape(N, N).astype(jnp.int8)
    if n_pad != N:
        avg = jnp.pad(avg, (0, n_pad - N))
        mask_i8 = jnp.pad(mask_i8, ((0, n_pad - N), (0, n_pad - N)))
    avg_row = avg.reshape(1, n_pad)
    avg_col = avg.reshape(n_pad, 1)

    def k_index_map(c, i):
        # Clamp so over-covered tiles re-read a valid block; their contribution
        # is zeroed in-kernel by the global-index mask.
        return (jnp.minimum(c * ntpc + i, num_tiles - 1), 0)

    const_map = lambda c, i: (0, 0)

    kernel = functools.partial(
        _ae_loss_kernel, float(1.0 / distance), float(distance),
        float(margin_push), K, block_rows, ntpc, n_pad, has_cen)

    in_specs = ([pl.BlockSpec((block_rows, 128), k_index_map)] * len(k_inputs)
                + [pl.BlockSpec((1, n_pad), const_map),      # avg row
                   pl.BlockSpec((n_pad, 1), const_map),      # avg col
                   # TODO(synk): for very large N, tile the push term on its own
                   # grid axis (or a separate pallas_call) to respect v7x's
                   # smaller VMEM, and single-buffer these constant-index inputs.
                   pl.BlockSpec((n_pad, n_pad), const_map)]) # pair mask (i8)

    bytes_accessed = (sum(int(x.size) * x.dtype.itemsize for x in k_inputs)
                      + int(mask_i8.size) + 2 * n_pad * 4
                      + splits * 4 * 8 * 128 * 4)
    cost = pl.CostEstimate(flops=8 * K128 + 5 * n_pad * n_pad,
                           transcendentals=0,
                           bytes_accessed=bytes_accessed)

    out = pl.pallas_call(
        kernel,
        grid=(splits, ntpc),
        in_specs=in_specs,
        out_specs=pl.BlockSpec((1, 4, 8, 128), lambda c, i: (c, 0, 0, 0)),
        out_shape=jax.ShapeDtypeStruct((splits, 4, 8, 128), jnp.float32),
        compiler_params=pltpu.CompilerParams(
            dimension_semantics=("parallel", "arbitrary")),
        cost_estimate=cost,
    )(*k_inputs, avg_row, avg_col, mask_i8)

    pull_num = out[:, 0].sum()
    push_sum = out[:, 2].sum()
    cnt = out[:, 3].sum()

    if has_cen:
        pull = pull_num / out[:, 1].sum()
        # push = 0 unless mask.any(); else dist[mask].sum() / mask.sum()
        push = jnp.where(cnt > 0, push_sum / jnp.maximum(cnt, 1.0), 0.0)
    else:
        pull = pull_num / jnp.float32(K)
        # dist[mask].mean(): NaN when mask empty, matching torch .mean() of empty
        push = push_sum / cnt

    return pull_factor * pull, push_factor * push


def _reference(lof_tag, avg, gather, mask, cen, *, pull_factor, push_factor,
               distance, margin_push):
    g = jnp.round(gather / distance) * distance
    tag = (lof_tag - jnp.round(g)) ** 2
    dist = avg[None, :] - avg[:, None]
    dist = jnp.maximum(distance + margin_push - jnp.abs(dist), 0.0)
    dist_sum = jnp.where(mask, dist, 0.0).sum()
    cnt = mask.sum()
    if cen is not None:
        pull = (tag * cen).sum() / cen.sum()
        push = jnp.where(mask.any(), dist_sum / cnt, 0.0)
    else:
        pull = tag.mean()
        push = dist_sum / cnt
    return pull_factor * pull, push_factor * push


if __name__ == "__main__":
    key = jax.random.PRNGKey(0)
    k0, k1, k2, k3, k4 = jax.random.split(key, 5)

    hp = dict(pull_factor=0.25, push_factor=0.25,
              distance=1.0, margin_push=0.5)

    # ---- Case 1: centerness given, K multiple of 128, single tile ----
    K, N = 256, 128
    lof_tag = jax.random.normal(k0, (K,), jnp.float32) * 3.0
    avg = jax.random.normal(k1, (N,), jnp.float32) * 3.0
    gather = jax.random.normal(k2, (K,), jnp.float32) * 3.0
    cen = jax.random.uniform(k3, (K,), jnp.float32, 0.1, 1.0)
    rnd = jax.random.uniform(k4, (N, N), jnp.float32)
    mask = (rnd < 0.3) & (~jnp.eye(N, dtype=bool))

    pull, push = ae_loss(lof_tag, avg, gather, mask, cen, **hp)
    jax.block_until_ready((pull, push))
    rp, rq = _reference(lof_tag, avg, gather, mask, cen, **hp)
    assert jnp.allclose(pull, rp, rtol=1e-5, atol=1e-5), (pull, rp)
    assert jnp.allclose(push, rq, rtol=1e-5, atol=1e-5), (push, rq)

    # ---- Case 2: no centerness, K NOT a multiple of 128 (ragged tail) ----
    K2 = 200
    lof_tag2 = jax.random.normal(k0, (K2,), jnp.float32) * 2.0
    gather2 = jax.random.normal(k2, (K2,), jnp.float32) * 2.0
    pull2, push2 = ae_loss(lof_tag2, avg, gather2, mask, None, **hp)
    jax.block_until_ready((pull2, push2))
    rp2, rq2 = _reference(lof_tag2, avg, gather2, mask, None, **hp)
    assert jnp.allclose(pull2, rp2, rtol=1e-5, atol=1e-5), (pull2, rp2)
    assert jnp.allclose(push2, rq2, rtol=1e-5, atol=1e-5), (push2, rq2)

    # ---- Case 3: many tiles + 2-way core split + ragged K + padded N ----
    K3, N3 = 4133, 96
    lt3 = jax.random.normal(k0, (K3,), jnp.float32) * 2.0
    gt3 = jax.random.normal(k2, (K3,), jnp.float32) * 2.0
    cn3 = jax.random.uniform(k3, (K3,), jnp.float32, 0.1, 1.0)
    avg3 = jax.random.normal(k1, (N3,), jnp.float32) * 3.0
    rnd3 = jax.random.uniform(k4, (N3, N3), jnp.float32)
    mask3 = (rnd3 < 0.3) & (~jnp.eye(N3, dtype=bool))
    pull3, push3 = ae_loss(lt3, avg3, gt3, mask3, cn3, max_block_rows=8, **hp)
    jax.block_until_ready((pull3, push3))
    rp3, rq3 = _reference(lt3, avg3, gt3, mask3, cn3, **hp)
    assert jnp.allclose(pull3, rp3, rtol=1e-4, atol=1e-5), (pull3, rp3)
    assert jnp.allclose(push3, rq3, rtol=1e-4, atol=1e-5), (push3, rq3)

    print("KERNEL_OK")
</pallas_src>

<mosaic_0001>
module attributes {stable_mosaic.version = 11 : i64} {
  func.func @_ae_loss_kernel(%arg0: i32, %arg1: i32, %arg2: memref<2x128xf32, #tpu.memory_space<vmem>>, %arg3: memref<2x128xf32, #tpu.memory_space<vmem>>, %arg4: memref<2x128xf32, #tpu.memory_space<vmem>>, %arg5: memref<1x128xf32, #tpu.memory_space<vmem>>, %arg6: memref<128x1xf32, #tpu.memory_space<vmem>>, %arg7: memref<128x128xi8, #tpu.memory_space<vmem>>, %arg8: memref<1x4x8x128xf32, #tpu.memory_space<vmem>>) attributes {dimension_semantics = [#tpu.dimension_semantics<parallel>, #tpu.dimension_semantics<arbitrary>], iteration_bounds = array<i64: 1, 1>, scalar_prefetch = 0 : i64, scratch_operands = 0 : i64, tpu.core_type = #tpu.core_type<tc>, window_params = [{transform_indices = @transform_0, window_bounds = array<i64: 2, 128>}, {transform_indices = @transform_1, window_bounds = array<i64: 2, 128>}, {transform_indices = @transform_2, window_bounds = array<i64: 2, 128>}, {pipeline_mode = #tpu.pipeline_mode<synchronous>, transform_indices = @transform_3, window_bounds = array<i64: 1, 128>}, {pipeline_mode = #tpu.pipeline_mode<synchronous>, transform_indices = @transform_4, window_bounds = array<i64: 128, 1>}, {pipeline_mode = #tpu.pipeline_mode<synchronous>, transform_indices = @transform_5, window_bounds = array<i64: 128, 128>}, {transform_indices = @transform_6, window_bounds = array<i64: 1, 4, 8, 128>}]} {
    %c0_i32 = arith.constant 0 : i32
    %0 = arith.cmpi eq, %arg1, %c0_i32 : i32
    %1 = arith.extui %0 : i1 to i32
    %c0_i32_0 = arith.constant 0 : i32
    %2 = arith.cmpi ne, %1, %c0_i32_0 : i32
    scf.if %2 {
      %cst_36 = arith.constant 0.000000e+00 : f32
      %76 = vector.broadcast %cst_36 : f32 to vector<1x4x8x128xf32>
      %c0_37 = arith.constant 0 : index
      %c0_38 = arith.constant 0 : index
      %c0_39 = arith.constant 0 : index
      %c0_40 = arith.constant 0 : index
      %77 = vector.load %arg8[%c0_37, %c0_38, %c0_39, %c0_40] : memref<1x4x8x128xf32, #tpu.memory_space<vmem>>, vector<1x4x8x128xf32>
      tpu.vector_store %arg8[%c0_37, %c0_38, %c0_39, %c0_40], %76 {strides = array<i32>} : memref<1x4x8x128xf32, #tpu.memory_space<vmem>>, vector<1x4x8x128xf32>,
    } else {
    }
    %c0_i32_1 = arith.constant 0 : i32
    %3 = arith.cmpi eq, %arg0, %c0_i32_1 : i32
    %c0_i32_2 = arith.constant 0 : i32
    %4 = arith.cmpi eq, %arg1, %c0_i32_2 : i32
    %5 = arith.andi %3, %4 : i1
    %6 = arith.extui %5 : i1 to i32
    %c0_i32_3 = arith.constant 0 : i32
    %7 = arith.cmpi ne, %6, %c0_i32_3 : i32
    scf.if %7 {
      %c0_36 = arith.constant 0 : index
      %c0_37 = arith.constant 0 : index
      %76 = vector.load %arg5[%c0_36, %c0_37] : memref<1x128xf32, #tpu.memory_space<vmem>>, vector<1x128xf32>
      %c0_38 = arith.constant 0 : index
      %c0_39 = arith.constant 0 : index
      %77 = vector.load %arg6[%c0_38, %c0_39] : memref<128x1xf32, #tpu.memory_space<vmem>>, vector<128x1xf32>
      %78 = vector.shape_cast %76 : vector<1x128xf32> to vector<1x128xf32>
      %79 = vector.broadcast %78 : vector<1x128xf32> to vector<128x128xf32>
      %80 = vector.shape_cast %77 : vector<128x1xf32> to vector<128x1xf32>
      %81 = vector.broadcast %80 : vector<128x1xf32> to vector<128x128xf32>
      %82 = arith.subf %79, %81 : vector<128x128xf32>
      %83 = math.absf %82 : vector<128x128xf32>
      %cst_40 = arith.constant 1.500000e+00 : f32
      %84 = vector.broadcast %cst_40 : f32 to vector<128x128xf32>
      %85 = arith.subf %84, %83 : vector<128x128xf32>
      %cst_41 = arith.constant 0.000000e+00 : f32
      %86 = vector.broadcast %cst_41 : f32 to vector<128x128xf32>
      %87 = arith.maximumf %85, %86 : vector<128x128xf32>
      %c0_42 = arith.constant 0 : index
      %c0_43 = arith.constant 0 : index
      %88 = vector.load %arg7[%c0_42, %c0_43] : memref<128x128xi8, #tpu.memory_space<vmem>>, vector<128x128xi8>
      %89 = arith.sitofp %88 : vector<128x128xi8> to vector<128x128xf32>
      %90 = arith.mulf %87, %89 : vector<128x128xf32>
      %91 = vector.shape_cast %90 : vector<128x128xf32> to vector<1x128x128xf32>
      %cst_44 = arith.constant dense<0.000000e+00> : vector<1xf32>
      %92 = vector.multi_reduction <add>, %91, %cst_44 [1, 2] : vector<1x128x128xf32> to vector<1xf32>
      %93 = vector.shape_cast %92 : vector<1xf32> to vector<1x1x1xf32>
      %94 = vector.extract %93[0, 0, 0] : f32 from vector<1x1x1xf32>
      %95 = tpu.iota {dimensions = array<i32: 0>} : vector<8x128xi32>
      %96 = tpu.iota {dimensions = array<i32: 1>} : vector<8x128xi32>
      %c0_i32_45 = arith.constant 0 : i32
      %97 = vector.broadcast %c0_i32_45 : i32 to vector<8x128xi32>
      %98 = arith.cmpi eq, %95, %97 : vector<8x128xi32>
      %c0_i32_46 = arith.constant 0 : i32
      %99 = vector.broadcast %c0_i32_46 : i32 to vector<8x128xi32>
      %100 = arith.cmpi eq, %96, %99 : vector<8x128xi32>
      %101 = arith.andi %98, %100 : vector<8x128xi1>
      %cst_47 = arith.constant 0.000000e+00 : f32
      %102 = vector.broadcast %94 : f32 to vector<8x128xf32>
      %103 = vector.broadcast %cst_47 : f32 to vector<8x128xf32>
      %104 = arith.select %101, %102, %103 : vector<8x128xi1>, vector<8x128xf32>
      %c0_48 = arith.constant 0 : index
      %c2 = arith.constant 2 : index
      %c0_49 = arith.constant 0 : index
      %c0_50 = arith.constant 0 : index
      %105 = vector.load %arg8[%c0_48, %c2, %c0_49, %c0_50] : memref<1x4x8x128xf32, #tpu.memory_space<vmem>>, vector<1x1x8x128xf32>
      %106 = vector.shape_cast %105 : vector<1x1x8x128xf32> to vector<8x128xf32>
      %107 = vector.shape_cast %104 : vector<8x128xf32> to vector<1x1x8x128xf32>
      tpu.vector_store %arg8[%c0_48, %c2, %c0_49, %c0_50], %107 {strides = array<i32>} : memref<1x4x8x128xf32, #tpu.memory_space<vmem>>, vector<1x1x8x128xf32>,
      %108 = vector.shape_cast %89 : vector<128x128xf32> to vector<1x128x128xf32>
      %cst_51 = arith.constant dense<0.000000e+00> : vector<1xf32>
      %109 = vector.multi_reduction <add>, %108, %cst_51 [1, 2] : vector<1x128x128xf32> to vector<1xf32>
      %110 = vector.shape_cast %109 : vector<1xf32> to vector<1x1x1xf32>
      %111 = vector.extract %110[0, 0, 0] : f32 from vector<1x1x1xf32>
      %112 = tpu.iota {dimensions = array<i32: 0>} : vector<8x128xi32>
      %113 = tpu.iota {dimensions = array<i32: 1>} : vector<8x128xi32>
      %c0_i32_52 = arith.constant 0 : i32
      %114 = vector.broadcast %c0_i32_52 : i32 to vector<8x128xi32>
      %115 = arith.cmpi eq, %112, %114 : vector<8x128xi32>
      %c0_i32_53 = arith.constant 0 : i32
      %116 = vector.broadcast %c0_i32_53 : i32 to vector<8x128xi32>
      %117 = arith.cmpi eq, %113, %116 : vector<8x128xi32>
      %118 = arith.andi %115, %117 : vector<8x128xi1>
      %cst_54 = arith.constant 0.000000e+00 : f32
      %119 = vector.broadcast %111 : f32 to vector<8x128xf32>
      %120 = vector.broadcast %cst_54 : f32 to vector<8x128xf32>
      %121 = arith.select %118, %119, %120 : vector<8x128xi1>, vector<8x128xf32>
      %c0_55 = arith.constant 0 : index
      %c3 = arith.constant 3 : index
      %c0_56 = arith.constant 0 : index
      %c0_57 = arith.constant 0 : index
      %122 = vector.load %arg8[%c0_55, %c3, %c0_56, %c0_57] : memref<1x4x8x128xf32, #tpu.memory_space<vmem>>, vector<1x1x8x128xf32>
      %123 = vector.shape_cast %122 : vector<1x1x8x128xf32> to vector<8x128xf32>
      %124 = vector.shape_cast %121 : vector<8x128xf32> to vector<1x1x8x128xf32>
      tpu.vector_store %arg8[%c0_55, %c3, %c0_56, %c0_57], %124 {strides = array<i32>} : memref<1x4x8x128xf32, #tpu.memory_space<vmem>>, vector<1x1x8x128xf32>,
    } else {
    }
    %c1_i32 = arith.constant 1 : i32
    %8 = arith.muli %arg0, %c1_i32 : i32
    %9 = arith.addi %8, %arg1 : i32
    %c256_i32 = arith.constant 256 : i32
    %10 = arith.muli %9, %c256_i32 : i32
    %11 = tpu.iota {dimensions = array<i32: 0>} : vector<2x128xi32>
    %12 = tpu.iota {dimensions = array<i32: 1>} : vector<2x128xi32>
    %c128_i32 = arith.constant 128 : i32
    %13 = vector.broadcast %c128_i32 : i32 to vector<2x128xi32>
    %14 = arith.muli %11, %13 : vector<2x128xi32>
    %15 = vector.broadcast %10 : i32 to vector<2x128xi32>
    %16 = arith.addi %15, %14 : vector<2x128xi32>
    %17 = arith.addi %16, %12 : vector<2x128xi32>
    %c256_i32_4 = arith.constant 256 : i32
    %18 = vector.broadcast %c256_i32_4 : i32 to vector<2x128xi32>
    %19 = arith.cmpi slt, %17, %18 : vector<2x128xi32>
    %c0 = arith.constant 0 : index
    %c0_5 = arith.constant 0 : index
    %20 = vector.load %arg3[%c0, %c0_5] : memref<2x128xf32, #tpu.memory_space<vmem>>, vector<2x128xf32>
    %cst = arith.constant 1.000000e+00 : f32
    %21 = vector.broadcast %cst : f32 to vector<2x128xf32>
    %22 = arith.mulf %20, %21 : vector<2x128xf32>
    %23 = math.roundeven %22 : vector<2x128xf32>
    %cst_6 = arith.constant 1.000000e+00 : f32
    %24 = vector.broadcast %cst_6 : f32 to vector<2x128xf32>
    %25 = arith.mulf %23, %24 : vector<2x128xf32>
    %c0_7 = arith.constant 0 : index
    %c0_8 = arith.constant 0 : index
    %26 = vector.load %arg2[%c0_7, %c0_8] : memref<2x128xf32, #tpu.memory_space<vmem>>, vector<2x128xf32>
    %27 = math.roundeven %25 : vector<2x128xf32>
    %28 = arith.subf %26, %27 : vector<2x128xf32>
    %29 = arith.mulf %28, %28 : vector<2x128xf32>
    %c0_9 = arith.constant 0 : index
    %c0_10 = arith.constant 0 : index
    %30 = vector.load %arg4[%c0_9, %c0_10] : memref<2x128xf32, #tpu.memory_space<vmem>>, vector<2x128xf32>
    %c0_11 = arith.constant 0 : index
    %c0_12 = arith.constant 0 : index
    %c0_13 = arith.constant 0 : index
    %c0_14 = arith.constant 0 : index
    %31 = vector.load %arg8[%c0_11, %c0_12, %c0_13, %c0_14] : memref<1x4x8x128xf32, #tpu.memory_space<vmem>>, vector<1x1x8x128xf32>
    %32 = vector.shape_cast %31 : vector<1x1x8x128xf32> to vector<8x128xf32>
    %33 = arith.mulf %29, %30 : vector<2x128xf32>
    %cst_15 = arith.constant 0.000000e+00 : f32
    %34 = vector.broadcast %cst_15 : f32 to vector<2x128xf32>
    %35 = arith.select %19, %33, %34 : vector<2x128xi1>, vector<2x128xf32>
    %36 = vector.shape_cast %35 : vector<2x128xf32> to vector<1x2x128xf32>
    %cst_16 = arith.constant dense<0.000000e+00> : vector<1xf32>
    %37 = vector.multi_reduction <add>, %36, %cst_16 [1, 2] : vector<1x2x128xf32> to vector<1xf32>
    %38 = vector.shape_cast %37 : vector<1xf32> to vector<1x1x1xf32>
    %39 = vector.extract %38[0, 0, 0] : f32 from vector<1x1x1xf32>
    %40 = tpu.iota {dimensions = array<i32: 0>} : vector<8x128xi32>
    %41 = tpu.iota {dimensions = array<i32: 1>} : vector<8x128xi32>
    %c0_i32_17 = arith.constant 0 : i32
    %42 = vector.broadcast %c0_i32_17 : i32 to vector<8x128xi32>
    %43 = arith.cmpi eq, %40, %42 : vector<8x128xi32>
    %c0_i32_18 = arith.constant 0 : i32
    %44 = vector.broadcast %c0_i32_18 : i32 to vector<8x128xi32>
    %45 = arith.cmpi eq, %41, %44 : vector<8x128xi32>
    %46 = arith.andi %43, %45 : vector<8x128xi1>
    %cst_19 = arith.constant 0.000000e+00 : f32
    %47 = vector.broadcast %39 : f32 to vector<8x128xf32>
    %48 = vector.broadcast %cst_19 : f32 to vector<8x128xf32>
    %49 = arith.select %46, %47, %48 : vector<8x128xi1>, vector<8x128xf32>
    %50 = arith.addf %32, %49 : vector<8x128xf32>
    %c0_20 = arith.constant 0 : index
    %c0_21 = arith.constant 0 : index
    %c0_22 = arith.constant 0 : index
    %c0_23 = arith.constant 0 : index
    %51 = vector.load %arg8[%c0_20, %c0_21, %c0_22, %c0_23] : memref<1x4x8x128xf32, #tpu.memory_space<vmem>>, vector<1x1x8x128xf32>
    %52 = vector.shape_cast %51 : vector<1x1x8x128xf32> to vector<8x128xf32>
    %53 = vector.shape_cast %50 : vector<8x128xf32> to vector<1x1x8x128xf32>
    tpu.vector_store %arg8[%c0_20, %c0_21, %c0_22, %c0_23], %53 {strides = array<i32>} : memref<1x4x8x128xf32, #tpu.memory_space<vmem>>, vector<1x1x8x128xf32>,
    %c0_24 = arith.constant 0 : index
    %c1 = arith.constant 1 : index
    %c0_25 = arith.constant 0 : index
    %c0_26 = arith.constant 0 : index
    %54 = vector.load %arg8[%c0_24, %c1, %c0_25, %c0_26] : memref<1x4x8x128xf32, #tpu.memory_space<vmem>>, vector<1x1x8x128xf32>
    %55 = vector.shape_cast %54 : vector<1x1x8x128xf32> to vector<8x128xf32>
    %cst_27 = arith.constant 0.000000e+00 : f32
    %56 = vector.broadcast %cst_27 : f32 to vector<2x128xf32>
    %57 = arith.select %19, %30, %56 : vector<2x128xi1>, vector<2x128xf32>
    %58 = vector.shape_cast %57 : vector<2x128xf32> to vector<1x2x128xf32>
    %cst_28 = arith.constant dense<0.000000e+00> : vector<1xf32>
    %59 = vector.multi_reduction <add>, %58, %cst_28 [1, 2] : vector<1x2x128xf32> to vector<1xf32>
    %60 = vector.shape_cast %59 : vector<1xf32> to vector<1x1x1xf32>
    %61 = vector.extract %60[0, 0, 0] : f32 from vector<1x1x1xf32>
    %62 = tpu.iota {dimensions = array<i32: 0>} : vector<8x128xi32>
    %63 = tpu.iota {dimensions = array<i32: 1>} : vector<8x128xi32>
    %c0_i32_29 = arith.constant 0 : i32
    %64 = vector.broadcast %c0_i32_29 : i32 to vector<8x128xi32>
    %65 = arith.cmpi eq, %62, %64 : vector<8x128xi32>
    %c0_i32_30 = arith.constant 0 : i32
    %66 = vector.broadcast %c0_i32_30 : i32 to vector<8x128xi32>
    %67 = arith.cmpi eq, %63, %66 : vector<8x128xi32>
    %68 = arith.andi %65, %67 : vector<8x128xi1>
    %cst_31 = arith.constant 0.000000e+00 : f32
    %69 = vector.broadcast %61 : f32 to vector<8x128xf32>
    %70 = vector.broadcast %cst_31 : f32 to vector<8x128xf32>
    %71 = arith.select %68, %69, %70 : vector<8x128xi1>, vector<8x128xf32>
    %72 = arith.addf %55, %71 : vector<8x128xf32>
    %c0_32 = arith.constant 0 : index
    %c1_33 = arith.constant 1 : index
    %c0_34 = arith.constant 0 : index
    %c0_35 = arith.constant 0 : index
    %73 = vector.load %arg8[%c0_32, %c1_33, %c0_34, %c0_35] : memref<1x4x8x128xf32, #tpu.memory_space<vmem>>, vector<1x1x8x128xf32>
    %74 = vector.shape_cast %73 : vector<1x1x8x128xf32> to vector<8x128xf32>
    %75 = vector.shape_cast %72 : vector<8x128xf32> to vector<1x1x8x128xf32>
    tpu.vector_store %arg8[%c0_32, %c1_33, %c0_34, %c0_35], %75 {strides = array<i32>} : memref<1x4x8x128xf32, #tpu.memory_space<vmem>>, vector<1x1x8x128xf32>,
    return
  }
  func.func @transform_0(%arg0: i32, %arg1: i32) -> (i32, i32) {
    %c1_i32 = arith.constant 1 : i32
    %0 = arith.muli %arg0, %c1_i32 : i32
    %1 = arith.addi %0, %arg1 : i32
    %c0_i32 = arith.constant 0 : i32
    %2 = arith.minsi %1, %c0_i32 : i32
    %c0_i32_0 = arith.constant 0 : i32
    %c0_i32_1 = arith.constant 0 : i32
    return %2, %c0_i32_0 : i32, i32
  }
  func.func @transform_1(%arg0: i32, %arg1: i32) -> (i32, i32) {
    %c1_i32 = arith.constant 1 : i32
    %0 = arith.muli %arg0, %c1_i32 : i32
    %1 = arith.addi %0, %arg1 : i32
    %c0_i32 = arith.constant 0 : i32
    %2 = arith.minsi %1, %c0_i32 : i32
    %c0_i32_0 = arith.constant 0 : i32
    %c0_i32_1 = arith.constant 0 : i32
    return %2, %c0_i32_0 : i32, i32
  }
  func.func @transform_2(%arg0: i32, %arg1: i32) -> (i32, i32) {
    %c1_i32 = arith.constant 1 : i32
    %0 = arith.muli %arg0, %c1_i32 : i32
    %1 = arith.addi %0, %arg1 : i32
    %c0_i32 = arith.constant 0 : i32
    %2 = arith.minsi %1, %c0_i32 : i32
    %c0_i32_0 = arith.constant 0 : i32
    %c0_i32_1 = arith.constant 0 : i32
    return %2, %c0_i32_0 : i32, i32
  }
  func.func @transform_3(%arg0: i32, %arg1: i32) -> (i32, i32) {
    %c0_i32 = arith.constant 0 : i32
    %c0_i32_0 = arith.constant 0 : i32
    %c0_i32_1 = arith.constant 0 : i32
    return %c0_i32, %c0_i32_0 : i32, i32
  }
  func.func @transform_4(%arg0: i32, %arg1: i32) -> (i32, i32) {
    %c0_i32 = arith.constant 0 : i32
    %c0_i32_0 = arith.constant 0 : i32
    %c0_i32_1 = arith.constant 0 : i32
    return %c0_i32, %c0_i32_0 : i32, i32
  }
  func.func @transform_5(%arg0: i32, %arg1: i32) -> (i32, i32) {
    %c0_i32 = arith.constant 0 : i32
    %c0_i32_0 = arith.constant 0 : i32
    %c0_i32_1 = arith.constant 0 : i32
    return %c0_i32, %c0_i32_0 : i32, i32
  }
  func.func @transform_6(%arg0: i32, %arg1: i32) -> (i32, i32, i32, i32) {
    %c0_i32 = arith.constant 0 : i32
    %c0_i32_0 = arith.constant 0 : i32
    %c0_i32_1 = arith.constant 0 : i32
    %c0_i32_2 = arith.constant 0 : i32
    return %arg0, %c0_i32, %c0_i32_0, %c0_i32_1 : i32, i32, i32, i32
  }
}

</mosaic_0001>

<llo_original>
// kernel: tpu_custom_call.1
$region0: #{tpu_custom_call.1}
  #allocation0 [shape = 'u32[]', space=smem, size = 0x4, offset = 0x4, fixed_abs, tag = 'smem constant byte address 0x4 - core index']
  #allocation1 [shape = 'u32[72,128]{1,0:T(1,128)}', space=vmem, size = 0x9000, scoped, tag = 'internal scratch']
  %s0 = inlined_call_operand.vmem [shape: f32[2,128], index: 0, kind: input, shape index: {}]
  %s1 = inlined_call_operand.vmem [shape: f32[2,128], index: 1, kind: input, shape index: {}]
  %s2 = inlined_call_operand.vmem [shape: f32[2,128], index: 2, kind: input, shape index: {}]
  %s3 = inlined_call_operand.vmem [shape: f32[1,128], index: 3, kind: input, shape index: {}]
  %s4 = inlined_call_operand.vmem [shape: f32[128,1], index: 4, kind: input, shape index: {}]
  %s5 = inlined_call_operand.vmem [shape: s8[128,128], index: 5, kind: input, shape index: {}]
  %s6 = inlined_call_operand.hbm [shape: f32[1,4,8,128], index: 6, kind: output, shape index: {}]
  %s7 = sld [smem:[#allocation0]]
  $region42: #{tpu_custom_call.1} parent=0
    _
  %s9 = ssub.s32 1, %s7
  %s10 = scalar_select 0, %s9, %s7
  $region1: #{tpu_custom_call.1} parent=0
    #allocation2 [shape = 'u8[16384]{0}', space=vmem, size = 0x4000, scoped, tag = 'output window, operand 0, single buffered']
    #allocation3 [shape = 's32[1]{0}', space=sflag, size = 0x4, scoped, tag = 'scoped memory for tpu_custom_call.1']
    %11 = vsyncpa [#allocation3], 0
    // Predicated region
    $region2: #{tpu_custom_call.1} parent=1 // pred_check
      _
    $region3: #{tpu_custom_call.1} parent=1 // pred_check_branch
      %13 = sbr.rel (0) target = $region5
    $region4: #{tpu_custom_call.1} parent=1 // pred_region
      %s14 = sadd.s32 0, 0
      %p15 = scmp.lt.s32.totalorder %s14, 0
      %s16 = scalar_select %p15, %s14, 0
      %p17 = scmp.lt.s32.totalorder %s16, 0
      %s18 = scalar_select %p17, %s16, 0
      %s19 = smul.addr %s18, 2
      %s20 = scalar_lea.vmem %s0, %s19
      %s21 = sadd.s32 0, 0
      %p22 = scmp.lt.s32.totalorder %s21, 0
      %s23 = scalar_select %p22, %s21, 0
    $region5: #{tpu_custom_call.1} parent=1 // pred_fallthru
      _
    // Predicated region
    $region6: #{tpu_custom_call.1} parent=1 // pred_check
      _
    $region7: #{tpu_custom_call.1} parent=1 // pred_check_branch
      %25 = sbr.rel (0) target = $region9
    $region8: #{tpu_custom_call.1} parent=1 // pred_region
      %s26 = sadd.s32 0, 0
      %p27 = scmp.lt.s32.totalorder %s26, 0
      %s28 = scalar_select %p27, %s26, 0
      %p29 = scmp.lt.s32.totalorder %s28, 0
      %s30 = scalar_select %p29, %s28, 0
      %s31 = smul.addr %s30, 2
      %s32 = scalar_lea.vmem %s1, %s31
      %s33 = sadd.s32 0, 0
      %p34 = scmp.lt.s32.totalorder %s33, 0
      %s35 = scalar_select %p34, %s33, 0
    $region9: #{tpu_custom_call.1} parent=1 // pred_fallthru
      _
    // Predicated region
    $region10: #{tpu_custom_call.1} parent=1 // pred_check
      _
    $region11: #{tpu_custom_call.1} parent=1 // pred_check_branch
      %37 = sbr.rel (0) target = $region13
    $region12: #{tpu_custom_call.1} parent=1 // pred_region
      %s38 = sadd.s32 0, 0
      %p39 = scmp.lt.s32.totalorder %s38, 0
      %s40 = scalar_select %p39, %s38, 0
      %p41 = scmp.lt.s32.totalorder %s40, 0
      %s42 = scalar_select %p41, %s40, 0
      %s43 = smul.addr %s42, 2
      %s44 = scalar_lea.vmem %s2, %s43
      %s45 = sadd.s32 0, 0
      %p46 = scmp.lt.s32.totalorder %s45, 0
      %s47 = scalar_select %p46, %s45, 0
    $region13: #{tpu_custom_call.1} parent=1 // pred_fallthru
      _
    // Predicated region
    $region14: #{tpu_custom_call.1} parent=1 // pred_check
      _
    $region15: #{tpu_custom_call.1} parent=1 // pred_check_branch
      %49 = sbr.rel (0) target = $region17
    $region16: #{tpu_custom_call.1} parent=1 // pred_region
      _
    $region17: #{tpu_custom_call.1} parent=1 // pred_fallthru
      _
    // Predicated region
    $region18: #{tpu_custom_call.1} parent=1 // pred_check
      _
    $region19: #{tpu_custom_call.1} parent=1 // pred_check_branch
      %51 = sbr.rel (0) target = $region21
    $region20: #{tpu_custom_call.1} parent=1 // pred_region
      _
    $region21: #{tpu_custom_call.1} parent=1 // pred_fallthru
      _
    // Predicated region
    $region22: #{tpu_custom_call.1} parent=1 // pred_check
      _
    $region23: #{tpu_custom_call.1} parent=1 // pred_check_branch
      %53 = sbr.rel (0) target = $region25
    $region24: #{tpu_custom_call.1} parent=1 // pred_region
      _
    $region25: #{tpu_custom_call.1} parent=1 // pred_fallthru
      _
    %s54 = sadd.s32 0, 0
    %p55 = scmp.lt.s32.totalorder %s54, 0
    %s56 = scalar_select %p55, %s54, 0
    %p57 = scmp.lt.s32.totalorder %s56, 0
    %s58 = scalar_select %p57, %s56, 0
    %s59 = smul.addr %s58, 2
    %s60 = scalar_lea.vmem %s0, %s59
    %s61 = sadd.s32 0, 0
    %p62 = scmp.lt.s32.totalorder %s61, 0
    %s63 = scalar_select %p62, %s61, 0
    %p64 = scmp.lt.s32.totalorder %s63, 0
    %s65 = scalar_select %p64, %s63, 0
    %s66 = smul.addr %s65, 2
    %s67 = scalar_lea.vmem %s1, %s66
    %s68 = sadd.s32 0, 0
    %p69 = scmp.lt.s32.totalorder %s68, 0
    %s70 = scalar_select %p69, %s68, 0
    %p71 = scmp.lt.s32.totalorder %s70, 0
    %s72 = scalar_select %p71, %s70, 0
    %s73 = smul.addr %s72, 2
    %s74 = scalar_lea.vmem %s2, %s73
    %s75 = sadd.s32 0, 0
    %p76 = scmp.lt.s32.totalorder %s75, 0
    %s77 = scalar_select %p76, %s75, 0
    %p78 = scmp.lt.s32.totalorder %s77, 0
    %s79 = scalar_select %p78, %s77, 0
    %s80 = smul.addr %s79, 2
    %s81 = scalar_lea.vmem %s0, %s80
    %s82 = sadd.s32 0, 0
    %p83 = scmp.lt.s32.totalorder %s82, 0
    %s84 = scalar_select %p83, %s82, 0
    %s85 = sadd.s32 0, 0
    %p86 = scmp.lt.s32.totalorder %s85, 0
    %s87 = scalar_select %p86, %s85, 0
    %p88 = scmp.lt.s32.totalorder %s87, 0
    %s89 = scalar_select %p88, %s87, 0
    %s90 = smul.addr %s89, 2
    %s91 = scalar_lea.vmem %s1, %s90
    %s92 = sadd.s32 0, 0
    %p93 = scmp.lt.s32.totalorder %s92, 0
    %s94 = scalar_select %p93, %s92, 0
    %s95 = sadd.s32 0, 0
    %p96 = scmp.lt.s32.totalorder %s95, 0
    %s97 = scalar_select %p96, %s95, 0
    %p98 = scmp.lt.s32.totalorder %s97, 0
    %s99 = scalar_select %p98, %s97, 0
    %s100 = smul.addr %s99, 2
    %s101 = scalar_lea.vmem %s2, %s100
    %s102 = sadd.s32 0, 0
    %p103 = scmp.lt.s32.totalorder %s102, 0
    %s104 = scalar_select %p103, %s102, 0
    %p105 = scmp.eq.s32.totalorder 0, 0
    // Predicated region
    $region26: #{tpu_custom_call.1} parent=1 // pred_check
      %p106 = pneg %p105
    $region27: #{tpu_custom_call.1} parent=1 // pred_check_branch
      %108 = sbr.rel (%p106) target = $region29
    $region28: #{tpu_custom_call.1} parent=1 // pred_region
      %109 = vst [vmem:[#allocation2] sm:$0xff] 0.0
      %110 = vst [vmem:[#allocation2 + $0x8] sm:$0xff] 0.0
      %111 = vst [vmem:[#allocation2 + $0x10] sm:$0xff] 0.0
      %112 = vst [vmem:[#allocation2 + $0x18] sm:$0xff] 0.0
    $region29: #{tpu_custom_call.1} parent=1 // pred_fallthru
      _
    %p113 = scmp.eq.s32.totalorder 0, 0
    %p114 = pnand %p113, %p105
    %p115 = pneg %p114
    // Predicated region
    $region30: #{tpu_custom_call.1} parent=1 // pred_check
      _
    $region31: #{tpu_custom_call.1} parent=1 // pred_check_branch
      %117 = sbr.rel (%p114) target = $region33
    $region32: #{tpu_custom_call.1} parent=1 // pred_region
      %v118 = vld [vmem:[%s3] sm:$0x1]
      %v119 = vld [vmem:[%s4] sm:$0xff]
      %v120 = vld [vmem:[%s4 + $0x8] sm:$0xff]
      %v121 = vld [vmem:[%s4 + $0x10] sm:$0xff]
      %v122 = vld [vmem:[%s4 + $0x18] sm:$0xff]
      %v123 = vld [vmem:[%s4 + $0x20] sm:$0xff]
      %v124 = vld [vmem:[%s4 + $0x28] sm:$0xff]
      %v125 = vld [vmem:[%s4 + $0x30] sm:$0xff]
      %v126 = vld [vmem:[%s4 + $0x38] sm:$0xff]
      %v127 = vld [vmem:[%s4 + $0x40] sm:$0xff]
      %v128 = vld [vmem:[%s4 + $0x48] sm:$0xff]
      %v129 = vld [vmem:[%s4 + $0x50] sm:$0xff]
      %v130 = vld [vmem:[%s4 + $0x58] sm:$0xff]
      %v131 = vld [vmem:[%s4 + $0x60] sm:$0xff]
      %v132 = vld [vmem:[%s4 + $0x68] sm:$0xff]
      %v133 = vld [vmem:[%s4 + $0x70] sm:$0xff]
      %v134 = vld [vmem:[%s4 + $0x78] sm:$0xff]
      %v136 = vperm.slane %v118, 0
      %139 = vset.pattern.permute.xlu0 0
      %140 = vperm.xlu0 %139, %v119
      %v141 = vpop.permute.xlu0 %140
      %144 = vset.pattern.permute.xlu0 0
      %145 = vperm.xlu0 %144, %v120
      %v146 = vpop.permute.xlu0 %145
      %149 = vset.pattern.permute.xlu0 0
      %150 = vperm.xlu0 %149, %v121
      %v151 = vpop.permute.xlu0 %150
      %154 = vset.pattern.permute.xlu0 0
      %155 = vperm.xlu0 %154, %v122
      %v156 = vpop.permute.xlu0 %155
      %159 = vset.pattern.permute.xlu0 0
      %160 = vperm.xlu0 %159, %v123
      %v161 = vpop.permute.xlu0 %160
      %164 = vset.pattern.permute.xlu0 0
      %165 = vperm.xlu0 %164, %v124
      %v166 = vpop.permute.xlu0 %165
      %169 = vset.pattern.permute.xlu0 0
      %170 = vperm.xlu0 %169, %v125
      %v171 = vpop.permute.xlu0 %170
      %174 = vset.pattern.permute.xlu0 0
      %175 = vperm.xlu0 %174, %v126
      %v176 = vpop.permute.xlu0 %175
      %179 = vset.pattern.permute.xlu0 0
      %180 = vperm.xlu0 %179, %v127
      %v181 = vpop.permute.xlu0 %180
      %184 = vset.pattern.permute.xlu0 0
      %185 = vperm.xlu0 %184, %v128
      %v186 = vpop.permute.xlu0 %185
      %189 = vset.pattern.permute.xlu0 0
      %190 = vperm.xlu0 %189, %v129
      %v191 = vpop.permute.xlu0 %190
      %194 = vset.pattern.permute.xlu0 0
      %195 = vperm.xlu0 %194, %v130
      %v196 = vpop.permute.xlu0 %195
      %199 = vset.pattern.permute.xlu0 0
      %200 = vperm.xlu0 %199, %v131
      %v201 = vpop.permute.xlu0 %200
      %204 = vset.pattern.permute.xlu0 0
      %205 = vperm.xlu0 %204, %v132
      %v206 = vpop.permute.xlu0 %205
      %209 = vset.pattern.permute.xlu0 0
      %210 = vperm.xlu0 %209, %v133
      %v211 = vpop.permute.xlu0 %210
      %214 = vset.pattern.permute.xlu0 0
      %215 = vperm.xlu0 %214, %v134
      %v216 = vpop.permute.xlu0 %215
      %v218 = vsub.f32 %v136, %v141
      %v219 = vsub.f32 %v136, %v146
      %v220 = vsub.f32 %v136, %v151
      %v221 = vsub.f32 %v136, %v156
      %v222 = vsub.f32 %v136, %v161
      %v223 = vsub.f32 %v136, %v166
      %v224 = vsub.f32 %v136, %v171
      %v225 = vsub.f32 %v136, %v176
      %v226 = vsub.f32 %v136, %v181
      %v227 = vsub.f32 %v136, %v186
      %v228 = vsub.f32 %v136, %v191
      %v229 = vsub.f32 %v136, %v196
      %v230 = vsub.f32 %v136, %v201
      %v231 = vsub.f32 %v136, %v206
      %v232 = vsub.f32 %v136, %v211
      %v233 = vsub.f32 %v136, %v216
      %v234 = vand.u32 2147483647, %v218
      %v235 = vand.u32 2147483647, %v219
      %v236 = vand.u32 2147483647, %v220
      %v237 = vand.u32 2147483647, %v221
      %v238 = vand.u32 2147483647, %v222
      %v239 = vand.u32 2147483647, %v223
      %v240 = vand.u32 2147483647, %v224
      %v241 = vand.u32 2147483647, %v225
      %v242 = vand.u32 2147483647, %v226
      %v243 = vand.u32 2147483647, %v227
      %v244 = vand.u32 2147483647, %v228
      %v245 = vand.u32 2147483647, %v229
      %v246 = vand.u32 2147483647, %v230
      %v247 = vand.u32 2147483647, %v231
      %v248 = vand.u32 2147483647, %v232
      %v249 = vand.u32 2147483647, %v233
      %v250 = vsub.f32 1.5, %v234
      %v251 = vsub.f32 1.5, %v235
      %v252 = vsub.f32 1.5, %v236
      %v253 = vsub.f32 1.5, %v237
      %v254 = vsub.f32 1.5, %v238
      %v255 = vsub.f32 1.5, %v239
      %v256 = vsub.f32 1.5, %v240
      %v257 = vsub.f32 1.5, %v241
      %v258 = vsub.f32 1.5, %v242
      %v259 = vsub.f32 1.5, %v243
      %v260 = vsub.f32 1.5, %v244
      %v261 = vsub.f32 1.5, %v245
      %v262 = vsub.f32 1.5, %v246
      %v263 = vsub.f32 1.5, %v247
      %v264 = vsub.f32 1.5, %v248
      %v265 = vsub.f32 1.5, %v249
      %v266 = vmax.f32 %v250, 0.0
      %v267 = vmax.f32 %v251, 0.0
      %v268 = vmax.f32 %v252, 0.0
      %v269 = vmax.f32 %v253, 0.0
      %v270 = vmax.f32 %v254, 0.0
      %v271 = vmax.f32 %v255, 0.0
      %v272 = vmax.f32 %v256, 0.0
      %v273 = vmax.f32 %v257, 0.0
      %v274 = vmax.f32 %v258, 0.0
      %v275 = vmax.f32 %v259, 0.0
      %v276 = vmax.f32 %v260, 0.0
      %v277 = vmax.f32 %v261, 0.0
      %v278 = vmax.f32 %v262, 0.0
      %v279 = vmax.f32 %v263, 0.0
      %v280 = vmax.f32 %v264, 0.0
      %v281 = vmax.f32 %v265, 0.0
      %v282 = vld [vmem:[%s5] sm:$0xff]
      %v283 = vld [vmem:[%s5 + $0x8] sm:$0xff]
      %v284 = vld [vmem:[%s5 + $0x10] sm:$0xff]
      %v285 = vld [vmem:[%s5 + $0x18] sm:$0xff]
      %v286 = vunpack.c.0.s8 %v282
      %v287 = vunpack.c.1.s8 %v282
      %v288 = vunpack.c.2.s8 %v282
      %v289 = vunpack.c.3.s8 %v282
      %v290 = vunpack.c.0.s8 %v283
      %v291 = vunpack.c.1.s8 %v283
      %v292 = vunpack.c.2.s8 %v283
      %v293 = vunpack.c.3.s8 %v283
      %v294 = vunpack.c.0.s8 %v284
      %v295 = vunpack.c.1.s8 %v284
      %v296 = vunpack.c.2.s8 %v284
      %v297 = vunpack.c.3.s8 %v284
      %v298 = vunpack.c.0.s8 %v285
      %v299 = vunpack.c.1.s8 %v285
      %v300 = vunpack.c.2.s8 %v285
      %v301 = vunpack.c.3.s8 %v285
      %v302 = vcvt.s32.f32 %v286
      %v303 = vcvt.s32.f32 %v287
      %v304 = vcvt.s32.f32 %v288
      %v305 = vcvt.s32.f32 %v289
      %v306 = vcvt.s32.f32 %v290
      %v307 = vcvt.s32.f32 %v291
      %v308 = vcvt.s32.f32 %v292
      %v309 = vcvt.s32.f32 %v293
      %v310 = vcvt.s32.f32 %v294
      %v311 = vcvt.s32.f32 %v295
      %v312 = vcvt.s32.f32 %v296
      %v313 = vcvt.s32.f32 %v297
      %v314 = vcvt.s32.f32 %v298
      %v315 = vcvt.s32.f32 %v299
      %v316 = vcvt.s32.f32 %v300
      %v317 = vcvt.s32.f32 %v301
      %v318 = vmul.f32 %v266, %v302
      %v319 = vmul.f32 %v267, %v303
      %v320 = vmul.f32 %v268, %v304
      %v321 = vmul.f32 %v269, %v305
      %v322 = vmul.f32 %v270, %v306
      %v323 = vmul.f32 %v271, %v307
      %v324 = vmul.f32 %v272, %v308
      %v325 = vmul.f32 %v273, %v309
      %v326 = vmul.f32 %v274, %v310
      %v327 = vmul.f32 %v275, %v311
      %v328 = vmul.f32 %v276, %v312
      %v329 = vmul.f32 %v277, %v313
      %v330 = vmul.f32 %v278, %v314
      %v331 = vmul.f32 %v279, %v315
      %v332 = vmul.f32 %v280, %v316
      %v333 = vmul.f32 %v281, %v317
      %v334 = vadd.f32 %v318, %v319
      %v335 = vadd.f32 %v334, %v320
      %v336 = vadd.f32 %v335, %v321
      %v337 = vadd.f32 %v336, %v322
      %v338 = vadd.f32 %v337, %v323
      %v339 = vadd.f32 %v338, %v324
      %v340 = vadd.f32 %v339, %v325
      %v341 = vadd.f32 %v340, %v326
      %v342 = vadd.f32 %v341, %v327
      %v343 = vadd.f32 %v342, %v328
      %v344 = vadd.f32 %v343, %v329
      %v345 = vadd.f32 %v344, %v330
      %v346 = vadd.f32 %v345, %v331
      %v347 = vadd.f32 %v346, %v332
      %v348 = vadd.f32 %v347, %v333
      %349 = vadd.xlane.f32.xlu0 %v348
      %v350 = vpop.xlane.xlu0 %349
      %v351 = vrot.slane %v350, 4
      %v352 = vadd.f32 %v350, %v351
      %v353 = vrot.slane %v352, 2
      %v354 = vadd.f32 %v352, %v353
      %v355 = vrot.slane %v354, 1
      %v356 = vadd.f32 %v354, %v355
      %s357 = vtos %v356
      %v358 = vlaneseq
      %v359 = vshrl.u32 %v358, 7
      %v360 = vlaneseq
      %v361 = vand.u32 %v360, 127
      %vm362 = vcmp.eq.s32.totalorder %v359, 0
      %vm363 = vcmp.eq.s32.totalorder %v361, 0
      %vm364 = vmand %vm362, %vm363
      %v365 = vstv %s357
      %v366 = vsel %vm364, %v365, 0.0
      %s367 = scalar_lea.vmem [#allocation2], 16
      %368 = vst [vmem:[%s367] sm:$0xff] %v366
      %v369 = vadd.f32 %v302, %v303
      %v370 = vadd.f32 %v369, %v304
      %v371 = vadd.f32 %v370, %v305
      %v372 = vadd.f32 %v371, %v306
      %v373 = vadd.f32 %v372, %v307
      %v374 = vadd.f32 %v373, %v308
      %v375 = vadd.f32 %v374, %v309
      %v376 = vadd.f32 %v375, %v310
      %v377 = vadd.f32 %v376, %v311
      %v378 = vadd.f32 %v377, %v312
      %v379 = vadd.f32 %v378, %v313
      %v380 = vadd.f32 %v379, %v314
      %v381 = vadd.f32 %v380, %v315
      %v382 = vadd.f32 %v381, %v316
      %v383 = vadd.f32 %v382, %v317
      %384 = vadd.xlane.f32.xlu0 %v383
      %v385 = vpop.xlane.xlu0 %384
      %v386 = vrot.slane %v385, 4
      %v387 = vadd.f32 %v385, %v386
      %v388 = vrot.slane %v387, 2
      %v389 = vadd.f32 %v387, %v388
      %v390 = vrot.slane %v389, 1
      %v391 = vadd.f32 %v389, %v390
      %s392 = vtos %v391
      %v393 = vstv %s392
      %v394 = vsel %vm364, %v393, 0.0
      %s395 = scalar_lea.vmem [#allocation2], 24
      %396 = vst [vmem:[%s395] sm:$0xff] %v394
    $region33: #{tpu_custom_call.1} parent=1 // pred_fallthru
      _
    %s397 = sadd.s32 0, 0
    %s398 = smul.u32 %s397, 256
    %v399 = vlaneseq
    %v400 = vshrl.u32 %v399, 7
    %v401 = vlaneseq
    %v402 = vand.u32 %v401, 127
    %v403 = vmul.u32 %v400, 128
    %v404 = vstv %s398
    %v405 = vadd.s32 %v404, %v403
    %v406 = vadd.s32 %v405, %v402
    %vm407 = vcmp.lt.s32.totalorder %v406, 256
    %v408 = vld [vmem:[%s91] sm:$0x3]
    %v409 = vround.ne.pseudo %v408
    %v410 = vld [vmem:[%s81] sm:$0x3]
    %v411 = vround.ne.pseudo %v409
    %v412 = vsub.f32 %v410, %v411
    %v413 = vmul.f32 %v412, %v412
    %v414 = vld [vmem:[%s101] sm:$0x3]
    %v415 = vld [vmem:[#allocation2] sm:$0xff]
    %v416 = vmul.f32 %v413, %v414
    %v417 = vsel %vm407, %v416, 0.0
    %vm418 = vcmask 1041408
    %v419 = vsel %vm418, %v417, 0.0
    %420 = vadd.xlane.f32.xlu0 %v419
    %v421 = vpop.xlane.xlu0 %420
    %v422 = vrot.slane %v421, 4
    %v423 = vadd.f32 %v421, %v422
    %v424 = vrot.slane %v423, 2
    %v425 = vadd.f32 %v423, %v424
    %v426 = vrot.slane %v425, 1
    %v427 = vadd.f32 %v425, %v426
    %s428 = vtos %v427
    %vm429 = vcmp.eq.s32.totalorder %v400, 0
    %vm430 = vcmp.eq.s32.totalorder %v402, 0
    %vm431 = vmand %vm429, %vm430
    %v432 = vstv %s428
    %v433 = vsel %vm431, %v432, 0.0
    %v434 = vadd.f32 %v415, %v433
    %435 = vst [vmem:[#allocation2] sm:$0xff] %v434
    %s436 = scalar_lea.vmem [#allocation2], 8
    %v437 = vld [vmem:[%s436] sm:$0xff]
    %v438 = vsel %vm407, %v414, 0.0
    %v439 = vsel %vm418, %v438, 0.0
    %440 = vadd.xlane.f32.xlu0 %v439
    %v441 = vpop.xlane.xlu0 %440
    %v442 = vrot.slane %v441, 4
    %v443 = vadd.f32 %v441, %v442
    %v444 = vrot.slane %v443, 2
    %v445 = vadd.f32 %v443, %v444
    %v446 = vrot.slane %v445, 1
    %v447 = vadd.f32 %v445, %v446
    %s448 = vtos %v447
    %v449 = vstv %s448
    %v450 = vsel %vm431, %v449, 0.0
    %v451 = vadd.f32 %v437, %v450
    %452 = vst [vmem:[%s436] sm:$0xff] %v451
    // Predicated region
    $region34: #{tpu_custom_call.1} parent=1 // pred_check
      _
    $region35: #{tpu_custom_call.1} parent=1 // pred_check_branch
      %454 = sbr.rel (0) target = $region37
    $region36: #{tpu_custom_call.1} parent=1 // pred_region
      %456 = vsyncadd [#allocation3], 0
      %s457 = sshll.u32 [#allocation2], 4
      %s458 = int_to_ptr.vmem [resolvable:$true] %s457
      %s459 = sshll.u32 %s6, 4
      %s460 = int_to_ptr.hbm [resolvable:$true] %s459
      %465 = dma.vmem_to_hbm [thread:$0]  %s458, 512, %s460, [#allocation3], 128, 128, 8
    $region37: #{tpu_custom_call.1} parent=1 // pred_fallthru
      _
    // Predicated region
    $region38: #{tpu_custom_call.1} parent=1 // pred_check
      _
    $region39: #{tpu_custom_call.1} parent=1 // pred_check_branch
      %467 = sbr.rel (0) target = $region41
    $region40: #{tpu_custom_call.1} parent=1 // pred_region
      %469 = dma.done [#allocation3], 512
    $region41: #{tpu_custom_call.1} parent=1 // pred_fallthru
      _
    %470 = vsyncpa [#allocation3], 1

</llo_original>
